<compile_context>
chip_gen: v5e
topology: v5e:2x2
jax: 0.10.0
libtpu: 0.0.40
codegen_flags: <defaults>
</compile_context>

<pallas_src>
import functools
import math

import jax
import jax.numpy as jnp
from jax import lax
from jax.experimental import pallas as pl
from jax.experimental.pallas import tpu as pltpu


# ---------------------------------------------------------------------------
# VMEM budget: ~75% of physical VMEM, capped at 100 MiB.
#   v5e / v6e (128 MiB physical) -> 96 MiB; v7x (64 MiB physical) -> 48 MiB.
# ---------------------------------------------------------------------------
def _default_vmem_limit_bytes():
    fallback = 48 * 1024 * 1024          # safe on every generation
    try:
        info = pltpu.get_tpu_info()
        cap = int(getattr(info, "vmem_capacity_bytes", 0))
    except Exception:
        return fallback
    if cap <= 0:
        return fallback
    return min((cap * 3) // 4, 100 * 1024 * 1024)


_VMEM_LIMIT_BYTES = _default_vmem_limit_bytes()


def _simclr_kernel(q_ref, k_ref, loss_ref, m_ref, l_ref, pos_ref, *,
                   bsz, blk_q, blk_k, resident):
    # q_ref   : (blk_q, Dp) bf16, rows r*blk_q:(r+1)*blk_q of feats/sqrt(T)
    # k_ref   : resident -> (N, Dp) bf16 full matrix; streaming -> (blk_k, Dp)
    # loss_ref: (blk_q, 1) f32, per-row (lse - pos), written on last col tile
    # m_ref / l_ref / pos_ref : (blk_q, 1) f32 scratch
    r = pl.program_id(0)
    c = pl.program_id(1)
    row0 = r * blk_q
    col0 = c * blk_k

    @pl.when(c == 0)
    def _init():
        m_ref[...] = jnp.full(m_ref.shape, -jnp.inf, jnp.float32)
        l_ref[...] = jnp.zeros(l_ref.shape, jnp.float32)
        pos_ref[...] = jnp.zeros(pos_ref.shape, jnp.float32)

    q = q_ref[...]
    if resident:
        start = pl.multiple_of(col0, blk_k)
        k = k_ref[pl.ds(start, blk_k), :]
    else:
        k = k_ref[...]

    # (blk_q, blk_k) logit tile on the MXU: contract the feature dim of BOTH
    # operands (bf16 inputs, f32 accumulation) -- no transposed copy built.
    s = lax.dot_general(
        q, k,
        dimension_numbers=(((1,), (1,)), ((), ())),
        preferred_element_type=jnp.float32)

    # --- positive logit: only the column tile(s) that overlap the partner
    # range [p0, p0 + blk_q) pay the iota/compare/select cost.  blk_q divides
    # B, so every row in this tile lives in the same half and p0 is uniform.
    p0 = jnp.where(row0 < bsz, row0 + bsz, row0 - bsz)

    @pl.when(jnp.logical_and(p0 < col0 + blk_k, col0 < p0 + blk_q))
    def _extract_pos():
        local_row = lax.broadcasted_iota(jnp.int32, (blk_q, blk_k), 0)
        col_g = col0 + lax.broadcasted_iota(jnp.int32, (blk_q, blk_k), 1)
        hit = col_g == (p0 + local_row)
        pos_ref[...] += jnp.sum(jnp.where(hit, s, 0.0), axis=-1, keepdims=True)

    # --- online (flash-style) logsumexp update.  exp(-inf - finite) == 0 so
    # the masked diagonal and the -inf init drop out automatically.  At most
    # one diagonal element per tile row (blk_k >= 8 > 1), so the running max
    # always stays finite.
    def _online_update(s_val):
        m_prev = m_ref[...]
        m_new = jnp.maximum(m_prev, jnp.max(s_val, axis=-1, keepdims=True))
        alpha = jnp.exp(m_prev - m_new)
        l_ref[...] = l_ref[...] * alpha + jnp.sum(jnp.exp(s_val - m_new),
                                                  axis=-1, keepdims=True)
        m_ref[...] = m_new

    diag_overlap = jnp.logical_and(row0 < col0 + blk_k, col0 < row0 + blk_q)

    @pl.when(diag_overlap)
    def _masked_update():
        row_g = row0 + lax.broadcasted_iota(jnp.int32, (blk_q, blk_k), 0)
        col_g = col0 + lax.broadcasted_iota(jnp.int32, (blk_q, blk_k), 1)
        _online_update(jnp.where(row_g == col_g, -jnp.inf, s))

    @pl.when(jnp.logical_not(diag_overlap))
    def _plain_update():
        _online_update(s)

    @pl.when(c == pl.num_programs(1) - 1)
    def _finalize():
        lse = m_ref[...] + jnp.log(l_ref[...])
        loss_ref[...] = lse - pos_ref[...]


def _pick_tile(extent, candidates):
    for t in candidates:
        if extent % t == 0:
            return t
    return None


@functools.partial(jax.jit,
                   static_argnames=("temperature", "block_q", "block_k",
                                    "residency"))
def simclr_loss(features_orig, features_aug, *, temperature=0.07,
                block_q=None, block_k=None, residency="auto"):
    assert features_orig.shape == features_aug.shape, (
        "Original and augmented features must have same shape")
    b, d = features_orig.shape
    n = 2 * b
    if b % 8 != 0:
        # TODO(synk): pad + mask ragged batches (B % 8 != 0) instead of rejecting.
        raise ValueError(f"batch size must be a multiple of 8, got {b}")

    # Pad the feature dim to a multiple of 128 (full lanes / MXU K dim);
    # zero padding leaves every dot product unchanged.
    d_pad = ((d + 127) // 128) * 128

    # Row tile must divide B (keeps each row tile inside one half, partner
    # range contiguous, and num_r = 2*(B/tq) even -> both v7x cores get work).
    tq_cands = ((512, 256, 128, 64, 32, 16, 8) if d_pad <= 128
                else (256, 128, 64, 32, 16, 8))
    tq = block_q if block_q is not None else _pick_tile(b, tq_cands)
    tk = block_k if block_k is not None else _pick_tile(
        n, (512, 256, 128, 64, 32, 16, 8))
    assert tq is not None and b % tq == 0 and tq % 8 == 0, (tq, b)
    assert tk is not None and n % tk == 0 and tk % 8 == 0, (tk, n)

    num_r = n // tq          # row tiles (parallel axis)
    num_c = n // tk          # column tiles (reduction axis, last)

    # Fused concat + 1/sqrt(T) scale + bf16 cast + zero pad (single
    # elementwise pass under jit): (f/sqrt(T)) @ (f/sqrt(T)).T == f @ f.T / T,
    # so the kernel needs no per-tile temperature rescale.
    inv_sqrt_t = 1.0 / math.sqrt(temperature)
    feats = jnp.concatenate([features_orig.astype(jnp.float32),
                             features_aug.astype(jnp.float32)], axis=0)
    g = (feats * inv_sqrt_t).astype(jnp.bfloat16)
    if d_pad != d:
        g = jnp.pad(g, ((0, 0), (0, d_pad - d)))

    # Resident key if the (conservatively double-buffered) full bf16 key
    # matrix fits in half the VMEM budget; otherwise stream column tiles.
    if residency == "resident":
        resident = True
    elif residency == "stream":
        resident = False
    else:
        resident = (2 * n * d_pad * 2) <= (_VMEM_LIMIT_BYTES // 2)

    if resident:
        key_spec = pl.BlockSpec((n, d_pad), lambda r, c: (0, 0))
    else:
        key_spec = pl.BlockSpec((tk, d_pad), lambda r, c: (c, 0))

    kernel = functools.partial(_simclr_kernel, bsz=b, blk_q=tq, blk_k=tk,
                               resident=resident)

    try:
        cost = pl.CostEstimate(
            flops=2 * n * n * d_pad,
            transcendentals=n * n,
            bytes_accessed=2 * n * d_pad * 2 + n * 4)
    except Exception:
        cost = None

    grid_spec = pltpu.PrefetchScalarGridSpec(
        num_scalar_prefetch=0,
        grid=(num_r, num_c),
        in_specs=[
            pl.BlockSpec((tq, d_pad), lambda r, c: (r, 0)),   # query rows
            key_spec,                                          # key rows
        ],
        out_specs=pl.BlockSpec((tq, 1), lambda r, c: (r, 0)),
        scratch_shapes=[pltpu.VMEM((tq, 1), jnp.float32),   # running max
                        pltpu.VMEM((tq, 1), jnp.float32),   # running sum-exp
                        pltpu.VMEM((tq, 1), jnp.float32)],  # positive logit
    )

    per_row = pl.pallas_call(
        kernel,
        out_shape=jax.ShapeDtypeStruct((n, 1), jnp.float32),
        grid_spec=grid_spec,
        compiler_params=pltpu.CompilerParams(
            dimension_semantics=("parallel", "arbitrary"),
            vmem_limit_bytes=_VMEM_LIMIT_BYTES),
        cost_estimate=cost,
    )(g, g)

    return jnp.sum(per_row) / jnp.float32(n)


# ---------------------------------------------------------------------------
# Pure-JAX references for sanity checking.
# ---------------------------------------------------------------------------
def _simclr_loss_ref_f32(features_orig, features_aug, temperature=0.07):
    """Full-f32 reference matching the PyTorch module exactly."""
    b = features_orig.shape[0]
    n = 2 * b
    feats = jnp.concatenate([features_orig, features_aug], axis=0).astype(jnp.float32)
    sim = (feats @ feats.T) / temperature
    sim = jnp.where(jnp.eye(n, dtype=bool), -jnp.inf, sim)
    labels = jnp.concatenate([jnp.arange(b, n), jnp.arange(0, b)])
    m = jnp.max(sim, axis=-1, keepdims=True)
    lse = (m + jnp.log(jnp.sum(jnp.exp(sim - m), axis=-1, keepdims=True)))[:, 0]
    pos = sim[jnp.arange(n), labels]
    return jnp.mean(lse - pos)


def _simclr_loss_ref_bf16(features_orig, features_aug, temperature=0.07):
    """Reference with the kernel's MXU precision (bf16 inputs, f32 accumulate)."""
    b = features_orig.shape[0]
    n = 2 * b
    feats = jnp.concatenate([features_orig, features_aug], axis=0).astype(jnp.float32)
    g = (feats * (1.0 / math.sqrt(temperature))).astype(jnp.bfloat16).astype(jnp.float32)
    sim = g @ g.T
    sim = jnp.where(jnp.eye(n, dtype=bool), -jnp.inf, sim)
    labels = jnp.concatenate([jnp.arange(b, n), jnp.arange(0, b)])
    m = jnp.max(sim, axis=-1, keepdims=True)
    lse = (m + jnp.log(jnp.sum(jnp.exp(sim - m), axis=-1, keepdims=True)))[:, 0]
    pos = sim[jnp.arange(n), labels]
    return jnp.mean(lse - pos)


if __name__ == "__main__":
    key = jax.random.PRNGKey(0)
    k1, k2 = jax.random.split(key)
    batch, feature_dim = 16, 32
    features_orig = jax.random.normal(k1, (batch, feature_dim), dtype=jnp.float32)
    features_aug = jax.random.normal(k2, (batch, feature_dim), dtype=jnp.float32)

    ref_bf16 = jax.block_until_ready(
        _simclr_loss_ref_bf16(features_orig, features_aug, 0.07))
    ref_f32 = jax.block_until_ready(
        _simclr_loss_ref_f32(features_orig, features_aug, 0.07))

    # Small tiles so the tiny test exercises the multi-tile online-logsumexp
    # path (grid = 4 row tiles x 4 column tiles) on BOTH key-residency paths,
    # plus the default auto-tiled path.
    loss_resident = jax.block_until_ready(
        simclr_loss(features_orig, features_aug, temperature=0.07,
                    block_q=8, block_k=8, residency="resident"))
    loss_stream = jax.block_until_ready(
        simclr_loss(features_orig, features_aug, temperature=0.07,
                    block_q=8, block_k=8, residency="stream"))
    loss_auto = jax.block_until_ready(
        simclr_loss(features_orig, features_aug, temperature=0.07))

    for loss in (loss_resident, loss_stream, loss_auto):
        assert bool(jnp.isfinite(loss)), loss
        # Tight check against a reference using the kernel's matmul precision.
        assert jnp.allclose(loss, ref_bf16, rtol=1e-3, atol=1e-2), (loss, ref_bf16)
        # Loose check against the full-f32 PyTorch-equivalent reference (the
        # only difference is bf16 rounding of the MXU inputs).
        assert jnp.allclose(loss, ref_f32, rtol=2e-2, atol=0.2), (loss, ref_f32)

    print("KERNEL_OK")
</pallas_src>

<mosaic_0001>
module attributes {stable_mosaic.version = 11 : i64} {
  func.func @_simclr_kernel(%arg0: i32, %arg1: i32, %arg2: memref<8x128xbf16, #tpu.memory_space<vmem>>, %arg3: memref<32x128xbf16, #tpu.memory_space<vmem>>, %arg4: memref<8x1xf32, #tpu.memory_space<vmem>>, %arg5: memref<8x1xf32, #tpu.memory_space<vmem>>, %arg6: memref<8x1xf32, #tpu.memory_space<vmem>>, %arg7: memref<8x1xf32, #tpu.memory_space<vmem>>) attributes {dimension_semantics = [#tpu.dimension_semantics<parallel>, #tpu.dimension_semantics<arbitrary>], iteration_bounds = array<i64: 4, 4>, scalar_prefetch = 0 : i64, scratch_operands = 3 : i64, tpu.core_type = #tpu.core_type<tc>, window_params = [{transform_indices = @transform_0, window_bounds = array<i64: 8, 128>}, {pipeline_mode = #tpu.pipeline_mode<synchronous>, transform_indices = @transform_1, window_bounds = array<i64: 32, 128>}, {transform_indices = @transform_2, window_bounds = array<i64: 8, 1>}]} {
    %c8_i32 = arith.constant 8 : i32
    %0 = arith.muli %arg0, %c8_i32 : i32
    %c8_i32_0 = arith.constant 8 : i32
    %1 = arith.muli %arg1, %c8_i32_0 : i32
    %c0_i32 = arith.constant 0 : i32
    %2 = arith.cmpi eq, %arg1, %c0_i32 : i32
    %3 = arith.extui %2 : i1 to i32
    %c0_i32_1 = arith.constant 0 : i32
    %4 = arith.cmpi ne, %3, %c0_i32_1 : i32
    scf.if %4 {
      %cst_14 = arith.constant 0xFF800000 : f32
      %34 = vector.broadcast %cst_14 : f32 to vector<8x1xf32>
      %c0_15 = arith.constant 0 : index
      %c0_16 = arith.constant 0 : index
      %35 = vector.load %arg5[%c0_15, %c0_16] : memref<8x1xf32, #tpu.memory_space<vmem>>, vector<8x1xf32>
      tpu.vector_store %arg5[%c0_15, %c0_16], %34 {strides = array<i32>} : memref<8x1xf32, #tpu.memory_space<vmem>>, vector<8x1xf32>,
      %cst_17 = arith.constant 0.000000e+00 : f32
      %36 = vector.broadcast %cst_17 : f32 to vector<8x1xf32>
      %c0_18 = arith.constant 0 : index
      %c0_19 = arith.constant 0 : index
      %37 = vector.load %arg6[%c0_18, %c0_19] : memref<8x1xf32, #tpu.memory_space<vmem>>, vector<8x1xf32>
      tpu.vector_store %arg6[%c0_18, %c0_19], %36 {strides = array<i32>} : memref<8x1xf32, #tpu.memory_space<vmem>>, vector<8x1xf32>,
      %cst_20 = arith.constant 0.000000e+00 : f32
      %38 = vector.broadcast %cst_20 : f32 to vector<8x1xf32>
      %c0_21 = arith.constant 0 : index
      %c0_22 = arith.constant 0 : index
      %39 = vector.load %arg7[%c0_21, %c0_22] : memref<8x1xf32, #tpu.memory_space<vmem>>, vector<8x1xf32>
      tpu.vector_store %arg7[%c0_21, %c0_22], %38 {strides = array<i32>} : memref<8x1xf32, #tpu.memory_space<vmem>>, vector<8x1xf32>,
    } else {
    }
    %c0 = arith.constant 0 : index
    %c0_2 = arith.constant 0 : index
    %5 = vector.load %arg2[%c0, %c0_2] : memref<8x128xbf16, #tpu.memory_space<vmem>>, vector<8x128xbf16>
    %6 = tpu.assume_multiple %1, 8 : i32
    %7 = arith.index_cast %6 : i32 to index
    %c0_3 = arith.constant 0 : index
    %8 = vector.load %arg3[%7, %c0_3] : memref<32x128xbf16, #tpu.memory_space<vmem>>, vector<8x128xbf16>
    %cst = arith.constant dense<0.000000e+00> : vector<8x8xf32>
    %9 = tpu.matmul %5, %8, %cst {dimension_numbers = #tpu.dot_dimension_numbers<[1], [1], [0], [0], [0, 0, 1, 0], [], []>} : vector<8x128xbf16>, vector<8x128xbf16>, vector<8x8xf32> -> vector<8x8xf32>
    %c16_i32 = arith.constant 16 : i32
    %10 = arith.cmpi slt, %0, %c16_i32 : i32
    %c16_i32_4 = arith.constant 16 : i32
    %11 = arith.addi %0, %c16_i32_4 : i32
    %c16_i32_5 = arith.constant 16 : i32
    %12 = arith.subi %0, %c16_i32_5 : i32
    %13 = arith.select %10, %11, %12 : i32
    %c8_i32_6 = arith.constant 8 : i32
    %14 = arith.addi %1, %c8_i32_6 : i32
    %15 = arith.cmpi slt, %13, %14 : i32
    %c8_i32_7 = arith.constant 8 : i32
    %16 = arith.addi %13, %c8_i32_7 : i32
    %17 = arith.cmpi slt, %1, %16 : i32
    %18 = arith.andi %15, %17 : i1
    %19 = arith.extui %18 : i1 to i32
    %c0_i32_8 = arith.constant 0 : i32
    %20 = arith.cmpi ne, %19, %c0_i32_8 : i32
    scf.if %20 {
      %34 = tpu.iota {dimensions = array<i32: 0>} : vector<8x8xi32>
      %35 = tpu.iota {dimensions = array<i32: 1>} : vector<8x8xi32>
      %36 = vector.broadcast %1 : i32 to vector<8x8xi32>
      %37 = arith.addi %36, %35 : vector<8x8xi32>
      %38 = vector.broadcast %13 : i32 to vector<8x8xi32>
      %39 = arith.addi %38, %34 : vector<8x8xi32>
      %40 = arith.cmpi eq, %37, %39 : vector<8x8xi32>
      %c0_14 = arith.constant 0 : index
      %c0_15 = arith.constant 0 : index
      %41 = vector.load %arg7[%c0_14, %c0_15] : memref<8x1xf32, #tpu.memory_space<vmem>>, vector<8x1xf32>
      %cst_16 = arith.constant 0.000000e+00 : f32
      %42 = vector.broadcast %cst_16 : f32 to vector<8x8xf32>
      %43 = arith.select %40, %9, %42 : vector<8x8xi1>, vector<8x8xf32>
      %cst_17 = arith.constant dense<0.000000e+00> : vector<8xf32>
      %44 = vector.multi_reduction <add>, %43, %cst_17 [1] : vector<8x8xf32> to vector<8xf32>
      %45 = vector.shape_cast %44 : vector<8xf32> to vector<8x1xf32>
      %46 = arith.addf %41, %45 : vector<8x1xf32>
      %c0_18 = arith.constant 0 : index
      %c0_19 = arith.constant 0 : index
      %47 = vector.load %arg7[%c0_18, %c0_19] : memref<8x1xf32, #tpu.memory_space<vmem>>, vector<8x1xf32>
      tpu.vector_store %arg7[%c0_18, %c0_19], %46 {strides = array<i32>} : memref<8x1xf32, #tpu.memory_space<vmem>>, vector<8x1xf32>,
    } else {
    }
    %c8_i32_9 = arith.constant 8 : i32
    %21 = arith.addi %1, %c8_i32_9 : i32
    %22 = arith.cmpi slt, %0, %21 : i32
    %c8_i32_10 = arith.constant 8 : i32
    %23 = arith.addi %0, %c8_i32_10 : i32
    %24 = arith.cmpi slt, %1, %23 : i32
    %25 = arith.andi %22, %24 : i1
    %26 = arith.extui %25 : i1 to i32
    %c0_i32_11 = arith.constant 0 : i32
    %27 = arith.cmpi ne, %26, %c0_i32_11 : i32
    scf.if %27 {
      %34 = tpu.iota {dimensions = array<i32: 0>} : vector<8x8xi32>
      %35 = vector.broadcast %0 : i32 to vector<8x8xi32>
      %36 = arith.addi %35, %34 : vector<8x8xi32>
      %37 = tpu.iota {dimensions = array<i32: 1>} : vector<8x8xi32>
      %38 = vector.broadcast %1 : i32 to vector<8x8xi32>
      %39 = arith.addi %38, %37 : vector<8x8xi32>
      %40 = arith.cmpi eq, %36, %39 : vector<8x8xi32>
      %cst_14 = arith.constant 0xFF800000 : f32
      %41 = vector.broadcast %cst_14 : f32 to vector<8x8xf32>
      %42 = arith.select %40, %41, %9 : vector<8x8xi1>, vector<8x8xf32>
      %c0_15 = arith.constant 0 : index
      %c0_16 = arith.constant 0 : index
      %43 = vector.load %arg5[%c0_15, %c0_16] : memref<8x1xf32, #tpu.memory_space<vmem>>, vector<8x1xf32>
      %cst_17 = arith.constant dense<0xFF800000> : vector<8xf32>
      %44 = vector.multi_reduction <maximumf>, %42, %cst_17 [1] : vector<8x8xf32> to vector<8xf32>
      %45 = vector.shape_cast %44 : vector<8xf32> to vector<8x1xf32>
      %46 = arith.maximumf %43, %45 : vector<8x1xf32>
      %47 = arith.subf %43, %46 : vector<8x1xf32>
      %48 = math.exp %47 : vector<8x1xf32>
      %c0_18 = arith.constant 0 : index
      %c0_19 = arith.constant 0 : index
      %49 = vector.load %arg6[%c0_18, %c0_19] : memref<8x1xf32, #tpu.memory_space<vmem>>, vector<8x1xf32>
      %50 = arith.mulf %49, %48 : vector<8x1xf32>
      %51 = vector.broadcast %46 : vector<8x1xf32> to vector<8x8xf32>
      %52 = arith.subf %42, %51 : vector<8x8xf32>
      %53 = math.exp %52 : vector<8x8xf32>
      %cst_20 = arith.constant dense<0.000000e+00> : vector<8xf32>
      %54 = vector.multi_reduction <add>, %53, %cst_20 [1] : vector<8x8xf32> to vector<8xf32>
      %55 = vector.shape_cast %54 : vector<8xf32> to vector<8x1xf32>
      %56 = arith.addf %50, %55 : vector<8x1xf32>
      %c0_21 = arith.constant 0 : index
      %c0_22 = arith.constant 0 : index
      %57 = vector.load %arg6[%c0_21, %c0_22] : memref<8x1xf32, #tpu.memory_space<vmem>>, vector<8x1xf32>
      tpu.vector_store %arg6[%c0_21, %c0_22], %56 {strides = array<i32>} : memref<8x1xf32, #tpu.memory_space<vmem>>, vector<8x1xf32>,
      %c0_23 = arith.constant 0 : index
      %c0_24 = arith.constant 0 : index
      %58 = vector.load %arg5[%c0_23, %c0_24] : memref<8x1xf32, #tpu.memory_space<vmem>>, vector<8x1xf32>
      tpu.vector_store %arg5[%c0_23, %c0_24], %46 {strides = array<i32>} : memref<8x1xf32, #tpu.memory_space<vmem>>, vector<8x1xf32>,
    } else {
    }
    %true = arith.constant true
    %28 = arith.xori %25, %true : i1
    %29 = arith.extui %28 : i1 to i32
    %c0_i32_12 = arith.constant 0 : i32
    %30 = arith.cmpi ne, %29, %c0_i32_12 : i32
    scf.if %30 {
      %c0_14 = arith.constant 0 : index
      %c0_15 = arith.constant 0 : index
      %34 = vector.load %arg5[%c0_14, %c0_15] : memref<8x1xf32, #tpu.memory_space<vmem>>, vector<8x1xf32>
      %cst_16 = arith.constant dense<0xFF800000> : vector<8xf32>
      %35 = vector.multi_reduction <maximumf>, %9, %cst_16 [1] : vector<8x8xf32> to vector<8xf32>
      %36 = vector.shape_cast %35 : vector<8xf32> to vector<8x1xf32>
      %37 = arith.maximumf %34, %36 : vector<8x1xf32>
      %38 = arith.subf %34, %37 : vector<8x1xf32>
      %39 = math.exp %38 : vector<8x1xf32>
      %c0_17 = arith.constant 0 : index
      %c0_18 = arith.constant 0 : index
      %40 = vector.load %arg6[%c0_17, %c0_18] : memref<8x1xf32, #tpu.memory_space<vmem>>, vector<8x1xf32>
      %41 = arith.mulf %40, %39 : vector<8x1xf32>
      %42 = vector.broadcast %37 : vector<8x1xf32> to vector<8x8xf32>
      %43 = arith.subf %9, %42 : vector<8x8xf32>
      %44 = math.exp %43 : vector<8x8xf32>
      %cst_19 = arith.constant dense<0.000000e+00> : vector<8xf32>
      %45 = vector.multi_reduction <add>, %44, %cst_19 [1] : vector<8x8xf32> to vector<8xf32>
      %46 = vector.shape_cast %45 : vector<8xf32> to vector<8x1xf32>
      %47 = arith.addf %41, %46 : vector<8x1xf32>
      %c0_20 = arith.constant 0 : index
      %c0_21 = arith.constant 0 : index
      %48 = vector.load %arg6[%c0_20, %c0_21] : memref<8x1xf32, #tpu.memory_space<vmem>>, vector<8x1xf32>
      tpu.vector_store %arg6[%c0_20, %c0_21], %47 {strides = array<i32>} : memref<8x1xf32, #tpu.memory_space<vmem>>, vector<8x1xf32>,
      %c0_22 = arith.constant 0 : index
      %c0_23 = arith.constant 0 : index
      %49 = vector.load %arg5[%c0_22, %c0_23] : memref<8x1xf32, #tpu.memory_space<vmem>>, vector<8x1xf32>
      tpu.vector_store %arg5[%c0_22, %c0_23], %37 {strides = array<i32>} : memref<8x1xf32, #tpu.memory_space<vmem>>, vector<8x1xf32>,
    } else {
    }
    %c3_i32 = arith.constant 3 : i32
    %31 = arith.cmpi eq, %arg1, %c3_i32 : i32
    %32 = arith.extui %31 : i1 to i32
    %c0_i32_13 = arith.constant 0 : i32
    %33 = arith.cmpi ne, %32, %c0_i32_13 : i32
    scf.if %33 {
      %c0_14 = arith.constant 0 : index
      %c0_15 = arith.constant 0 : index
      %34 = vector.load %arg5[%c0_14, %c0_15] : memref<8x1xf32, #tpu.memory_space<vmem>>, vector<8x1xf32>
      %c0_16 = arith.constant 0 : index
      %c0_17 = arith.constant 0 : index
      %35 = vector.load %arg6[%c0_16, %c0_17] : memref<8x1xf32, #tpu.memory_space<vmem>>, vector<8x1xf32>
      %36 = math.log %35 : vector<8x1xf32>
      %37 = arith.addf %34, %36 : vector<8x1xf32>
      %c0_18 = arith.constant 0 : index
      %c0_19 = arith.constant 0 : index
      %38 = vector.load %arg7[%c0_18, %c0_19] : memref<8x1xf32, #tpu.memory_space<vmem>>, vector<8x1xf32>
      %39 = arith.subf %37, %38 : vector<8x1xf32>
      %c0_20 = arith.constant 0 : index
      %c0_21 = arith.constant 0 : index
      %40 = vector.load %arg4[%c0_20, %c0_21] : memref<8x1xf32, #tpu.memory_space<vmem>>, vector<8x1xf32>
      tpu.vector_store %arg4[%c0_20, %c0_21], %39 {strides = array<i32>} : memref<8x1xf32, #tpu.memory_space<vmem>>, vector<8x1xf32>,
    } else {
    }
    return
  }
  func.func @transform_0(%arg0: i32, %arg1: i32) -> (i32, i32) {
    %c0_i32 = arith.constant 0 : i32
    %c0_i32_0 = arith.constant 0 : i32
    return %arg0, %c0_i32 : i32, i32
  }
  func.func @transform_1(%arg0: i32, %arg1: i32) -> (i32, i32) {
    %c0_i32 = arith.constant 0 : i32
    %c0_i32_0 = arith.constant 0 : i32
    %c0_i32_1 = arith.constant 0 : i32
    return %c0_i32, %c0_i32_0 : i32, i32
  }
  func.func @transform_2(%arg0: i32, %arg1: i32) -> (i32, i32) {
    %c0_i32 = arith.constant 0 : i32
    %c0_i32_0 = arith.constant 0 : i32
    return %arg0, %c0_i32 : i32, i32
  }
}

</mosaic_0001>

<llo_original>
// kernel: simclr_loss.1
$region0: #{simclr_loss.1}
  #allocation0 [shape = 'u32[]', space=smem, size = 0x4, offset = 0x4, fixed_abs, tag = 'smem constant byte address 0x4 - core index']
  #allocation1 [shape = 'u32[72,128]{1,0:T(1,128)}', space=vmem, size = 0x9000, scoped, tag = 'internal scratch']
  #allocation2 [shape = 'f32[8,1]{1,0:T(8,128)}', space=vmem, size = 0x1000, scoped, tag = 'scratch operand']
  #allocation3 [shape = 'f32[8,1]{1,0:T(8,128)}', space=vmem, size = 0x1000, scoped, tag = 'scratch operand']
  #allocation4 [shape = 'f32[8,1]{1,0:T(8,128)}', space=vmem, size = 0x1000, scoped, tag = 'scratch operand']
  %s0 = inlined_call_operand.vmem [shape: bf16[32,128], index: 0, kind: input, shape index: {}, may-alias: {0,1}]
  %s1 = inlined_call_operand.vmem [shape: bf16[32,128], index: 1, kind: input, shape index: {}, may-alias: {0,1}]
  %s2 = inlined_call_operand.vmem [shape: f32[32,1], index: 2, kind: output, shape index: {}]
  %s3 = sld [smem:[#allocation0]]
  $region61: #{simclr_loss.1} parent=0
    _
  %s5 = ssub.s32 1, %s3
  %s6 = scalar_select 0, %s5, %s3
  loop: start=0, step=1, limit=18
  $region2: #{simclr_loss.1} parent=0 // loop_pre_header
    _
  $region3: #{simclr_loss.1} parent=0 // loop_header
    %s8 = sphi 0, %s12
    %p9 = scmp.ge.s32.totalorder %s8, 18
    %s15 = sphi 0, %s27
    %s16 = sphi 0, %s23
    %s17 = sphi 0, %s15
    %s18 = sphi 0, %s16
    %s19 = sphi 0, %s17
    %s20 = sphi 0, %s18
    %s30 = sphi 0, %s32
    %s33 = sphi 0, %s30
    %s34 = sphi 0, %s33
    %s50 = sphi 0, %s34
    %s54 = sphi 0, %s54
    %s56 = sphi 0, %s54
    %s57 = sphi 0, %s56
    %s71 = sphi 0, %s57
    %s77 = sphi 0, %s79
    %s80 = sphi 0, %s77
    %s81 = sphi 0, %s80
    %s97 = sphi 0, %s81
  $region4: #{simclr_loss.1} parent=0 // loop_header_branch
    %11 = sbr.rel (%p9) target = $region8
  $region5: #{simclr_loss.1} parent=0 // loop_body
    %s13 = ssub.s32 %s8, 1
    %s14 = ssub.s32 %s8, 2
    %s21 = sadd.s32 1, %s16
    %p22 = scmp.ge.s32.totalorder %s21, 4
    %s23 = scalar_select %p22, 0, %s21
    %s24 = sadd.s32 1, %s15
    %s25 = scalar_select %p22, %s24, %s15
    %p26 = scmp.ge.s32.totalorder %s25, 4
    %s27 = scalar_select %p26, 0, %s25
    %s28 = ssub.s32 %s15, %s27
    %p29 = scmp.eq.s32.totalorder %s28, 0
    %s31 = sadd.s32 %s30, 1
    %s32 = scalar_select %p29, %s30, %s31
    %p35 = pneg %p29
    %p36 = scmp.eq.s32.totalorder %s8, 15
    %p37 = por %p35, %p36
    %p38 = scmp.ne.s32.totalorder %s30, %s33
    %p39 = scmp.eq.s32.totalorder %s8, 0
    %p40 = por %p38, %p39
    %p41 = scmp.ne.s32.totalorder %s30, %s33
    %p42 = scmp.eq.s32.totalorder %s13, 15
    %p43 = por %p41, %p42
    %p44 = scmp.ne.s32.totalorder %s33, %s34
    %p45 = scmp.eq.s32.totalorder %s13, 0
    %p46 = por %p44, %p45
    %p47 = scmp.ne.s32.totalorder %s33, %s34
    %p48 = scmp.eq.s32.totalorder %s14, 15
    %p49 = por %p47, %p48
    %p51 = scmp.ne.s32.totalorder %s34, %s50
    %p52 = scmp.eq.s32.totalorder %s14, 0
    %p53 = por %p51, %p52
    %s55 = sadd.s32 %s54, 1
    %p58 = scmp.eq.s32.totalorder %s8, 15
    %p59 = scmp.ne.s32.totalorder %s54, %s56
    %p60 = scmp.eq.s32.totalorder %s8, 0
    %p61 = por %p59, %p60
    %p62 = scmp.ne.s32.totalorder %s54, %s56
    %p63 = scmp.eq.s32.totalorder %s13, 15
    %p64 = por %p62, %p63
    %p65 = scmp.ne.s32.totalorder %s56, %s57
    %p66 = scmp.eq.s32.totalorder %s13, 0
    %p67 = por %p65, %p66
    %p68 = scmp.ne.s32.totalorder %s56, %s57
    %p69 = scmp.eq.s32.totalorder %s14, 15
    %p70 = por %p68, %p69
    %p72 = scmp.ne.s32.totalorder %s57, %s71
    %p73 = scmp.eq.s32.totalorder %s14, 0
    %p74 = por %p72, %p73
    %s75 = ssub.s32 %s15, %s27
    %p76 = scmp.eq.s32.totalorder %s75, 0
    %s78 = sadd.s32 %s77, 1
    %s79 = scalar_select %p76, %s77, %s78
    %p82 = pneg %p76
    %p83 = scmp.eq.s32.totalorder %s8, 15
    %p84 = por %p82, %p83
    %p85 = scmp.ne.s32.totalorder %s77, %s80
    %p86 = scmp.eq.s32.totalorder %s8, 0
    %p87 = por %p85, %p86
    %p88 = scmp.ne.s32.totalorder %s77, %s80
    %p89 = scmp.eq.s32.totalorder %s13, 15
    %p90 = por %p88, %p89
    %p91 = scmp.ne.s32.totalorder %s80, %s81
    %p92 = scmp.eq.s32.totalorder %s13, 0
    %p93 = por %p91, %p92
    %p94 = scmp.ne.s32.totalorder %s80, %s81
    %p95 = scmp.eq.s32.totalorder %s14, 15
    %p96 = por %p94, %p95
    %p98 = scmp.ne.s32.totalorder %s81, %s97
    %p99 = scmp.eq.s32.totalorder %s14, 0
    %p100 = por %p98, %p99
    %p101 = scmp.le.s32.totalorder 1, %s8
    %p102 = scmp.lt.s32.totalorder %s8, 17
    %p103 = pnand %p101, %p102
    %p104 = pneg %p103
    // Predicated region
    $region9: #{simclr_loss.1} parent=5 // pred_check
      _
    $region10: #{simclr_loss.1} parent=5 // pred_check_branch
      %106 = sbr.rel (%p103) target = $region12
    $region11: #{simclr_loss.1} parent=5 // pred_region
      %s107 = ssub.s32 %s8, 1
      // Predicated region
      $region13: #{simclr_loss.1} parent=11 // pred_check
        %p108 = pneg %p67
      $region14: #{simclr_loss.1} parent=11 // pred_check_branch
        %110 = sbr.rel (%p108) target = $region16
      $region15: #{simclr_loss.1} parent=11 // pred_region
        _
      $region16: #{simclr_loss.1} parent=11 // pred_fallthru
        _
    $region12: #{simclr_loss.1} parent=5 // pred_fallthru
      _
    %p111 = scmp.lt.s32.totalorder %s8, 16
    // Predicated region
    $region17: #{simclr_loss.1} parent=5 // pred_check
      %p112 = pneg %p111
    $region18: #{simclr_loss.1} parent=5 // pred_check_branch
      %114 = sbr.rel (%p112) target = $region20
    $region19: #{simclr_loss.1} parent=5 // pred_region
      // Predicated region
      $region21: #{simclr_loss.1} parent=19 // pred_check
        %p115 = pneg %p40
      $region22: #{simclr_loss.1} parent=19 // pred_check_branch
        %117 = sbr.rel (%p115) target = $region24
      $region23: #{simclr_loss.1} parent=19 // pred_region
        %p118 = scmp.lt.s32.totalorder %s15, 3
        %s119 = scalar_select %p118, %s15, 3
        %s120 = smul.addr %s119, 4
        %s121 = scalar_lea.vmem %s0, %s120
      $region24: #{simclr_loss.1} parent=19 // pred_fallthru
        _
    $region20: #{simclr_loss.1} parent=5 // pred_fallthru
      _
    %p122 = scmp.le.s32.totalorder 1, %s8
    %p123 = scmp.lt.s32.totalorder %s8, 17
    %p124 = pnand %p122, %p123
    %p125 = pneg %p124
    // Predicated region
    $region25: #{simclr_loss.1} parent=5 // pred_check
      _
    $region26: #{simclr_loss.1} parent=5 // pred_check_branch
      %127 = sbr.rel (%p124) target = $region28
    $region27: #{simclr_loss.1} parent=5 // pred_region
      %s128 = ssub.s32 %s8, 1
      %p129 = scmp.lt.s32.totalorder %s17, 3
      %s130 = scalar_select %p129, %s17, 3
      %s131 = smul.addr %s130, 4
      %s132 = scalar_lea.vmem %s0, %s131
      %p133 = pneg %p46
      %p134 = pneg %p43
      %p135 = pneg %p67
      %p136 = pneg %p64
      %p137 = pneg %p93
      %p138 = pneg %p90
      %p139 = scmp.lt.s32.totalorder %s17, 3
      %s140 = scalar_select %p139, %s17, 3
      %s141 = smul.addr %s140, 8
      %s142 = scalar_lea.vmem %s2, %s141
      %p143 = scmp.lt.s32.totalorder %s17, 3
      %s144 = scalar_select %p143, %s17, 3
      %s145 = smul.addr %s144, 4
      %s146 = scalar_lea.vmem %s0, %s145
      %p147 = scmp.lt.s32.totalorder %s17, 3
      %s148 = scalar_select %p147, %s17, 3
      %s149 = smul.addr %s148, 8
      %s150 = scalar_lea.vmem %s2, %s149
      %s152 = smul.u32 %s17, 8
      %s153 = smul.u32 %s18, 8
      %p154 = scmp.eq.s32.totalorder %s18, 0
      // Predicated region
      $region29: #{simclr_loss.1} parent=27 // pred_check
        %p155 = pneg %p154
      $region30: #{simclr_loss.1} parent=27 // pred_check_branch
        %157 = sbr.rel (%p155) target = $region32
      $region31: #{simclr_loss.1} parent=27 // pred_region
        %vm158 = vcmask 7168
        %159 = vst.msk [vmem:[#allocation2] sm:$0xff] %vm158, -inf
        %160 = vst.msk [vmem:[#allocation3] sm:$0xff] %vm158, 0.0
        %161 = vst.msk [vmem:[#allocation4] sm:$0xff] %vm158, 0.0
      $region32: #{simclr_loss.1} parent=27 // pred_fallthru
        _
      %v162 = vld [vmem:[%s146] sm:$0xf]
      %s163 = sshra.s32 %s153, 3
      %s164 = sand.u32 %s153, 7
      %s165 = smul.addr %s163, 4
      %s166 = scalar_lea.vmem %s1, %s165
      %v167 = vld [vmem:[%s166] sm:$0xf]
      %168 = vmatpush.bf16.xpose.msra.mxu0 0
      %169 = vmatpush.bf16.xpose.msra.mxu0 0
      %170 = vmatpush.bf16.xpose.msra.mxu0 0
      %171 = vmatpush.bf16.xpose.msra.mxu0 0
      %172 = vmatpush.bf16.xpose.msra.mxu0 0
      %173 = vmatpush.bf16.xpose.msra.mxu0 0
      %174 = vmatpush.bf16.xpose.msra.mxu0 0
      %175 = vmatpush.bf16.xpose.msra.mxu0 %v167
      %176 = vmatmul.bf16.gmra.mxu0 %v162
      %v177 = vpop.f32.mrf.mxu0
      %v178 = vadd.f32 0.0, %v177
      %v179 = vpop.f32.mrf.mxu0
      %180 = vdwg.mxu0
      %p181 = scmp.lt.s32.totalorder %s152, 16
      %s182 = sadd.s32 %s152, 16
      %s183 = ssub.s32 %s152, 16
      %s184 = scalar_select %p181, %s182, %s183
      %s185 = sadd.s32 %s153, 8
      %p186 = scmp.lt.s32.totalorder %s184, %s185
      %s187 = sadd.s32 %s184, 8
      %p188 = scmp.lt.s32.totalorder %s153, %s187
      %p189 = pnand %p186, %p188
      %p190 = pneg %p189
      // Predicated region
      $region33: #{simclr_loss.1} parent=27 // pred_check
        _
      $region34: #{simclr_loss.1} parent=27 // pred_check_branch
        %192 = sbr.rel (%p189) target = $region36
      $region35: #{simclr_loss.1} parent=27 // pred_region
        %v193 = vlaneseq
        %v194 = vshrl.u32 %v193, 7
        %v195 = vlaneseq
        %v196 = vand.u32 %v195, 127
        %v197 = vstv %s153
        %v198 = vadd.s32 %v197, %v196
        %v199 = vstv %s184
        %v200 = vadd.s32 %v199, %v194
        %vm201 = vcmp.eq.s32.totalorder %v198, %v200
        %v202 = vld [vmem:[#allocation4] sm:$0xff]
        %v203 = vsel %vm201, %v178, 0.0
        %vm204 = vcmask 64512
        %v205 = vsel %vm204, %v203, 0.0
        %206 = vadd.xlane.f32.xlu0 %v205
        %v207 = vpop.xlane.xlu0 %206
        %v208 = vadd.f32 %v202, %v207
        %vm209 = vcmask 7168
        %210 = vst.msk [vmem:[#allocation4] sm:$0xff] %vm209, %v208
      $region36: #{simclr_loss.1} parent=27 // pred_fallthru
        _
      %p211 = scmp.lt.s32.totalorder %s152, %s185
      %s212 = sadd.s32 %s152, 8
      %p213 = scmp.lt.s32.totalorder %s153, %s212
      %p214 = pnand %p211, %p213
      %p215 = pneg %p214
      // Predicated region
      $region37: #{simclr_loss.1} parent=27 // pred_check
        _
      $region38: #{simclr_loss.1} parent=27 // pred_check_branch
        %217 = sbr.rel (%p214) target = $region40
      $region39: #{simclr_loss.1} parent=27 // pred_region
        %v218 = vlaneseq
        %v219 = vshrl.u32 %v218, 7
        %v220 = vstv %s152
        %v221 = vadd.s32 %v220, %v219
        %v222 = vlaneseq
        %v223 = vand.u32 %v222, 127
        %v224 = vstv %s153
        %v225 = vadd.s32 %v224, %v223
        %vm226 = vcmp.eq.s32.totalorder %v221, %v225
        %v227 = vsel %vm226, -inf, %v178
        %v228 = vld [vmem:[#allocation2] sm:$0xff]
        %vm229 = vcmask 64512
        %v230 = vsel %vm229, %v227, -inf
        %231 = vmax.xlane.f32.xlu0 %v230
        %v232 = vpop.xlane.xlu0 %231
        %v233 = vmax.f32 %v228, %v232
        %v234 = vsub.f32 %v228, %v233
        %v235 = vmul.f32 %v234, 1.442695
        %v236 = vpow.pop %v235
        %v237 = vld [vmem:[#allocation3] sm:$0xff]
        %v238 = vmul.f32 %v237, %v236
        %240 = vset.pattern.permute.xlu0 0
        %241 = vperm.xlu0 %240, %v233
        %v242 = vpop.permute.xlu0 %241
        %v244 = vsub.f32 %v227, %v242
        %v245 = vmul.f32 %v244, 1.442695
        %v246 = vpow.pop %v245
        %v247 = vsel %vm229, %v246, 0.0
        %248 = vadd.xlane.f32.xlu0 %v247
        %v249 = vpop.xlane.xlu0 %248
        %v250 = vadd.f32 %v238, %v249
        %vm251 = vcmask 7168
        %252 = vst.msk [vmem:[#allocation3] sm:$0xff] %vm251, %v250
        %253 = vst.msk [vmem:[#allocation2] sm:$0xff] %vm251, %v233
      $region40: #{simclr_loss.1} parent=27 // pred_fallthru
        _
      %p254 = pneg %p215
      // Predicated region
      $region41: #{simclr_loss.1} parent=27 // pred_check
        _
      $region42: #{simclr_loss.1} parent=27 // pred_check_branch
        %256 = sbr.rel (%p215) target = $region44
      $region43: #{simclr_loss.1} parent=27 // pred_region
        %v257 = vld [vmem:[#allocation2] sm:$0xff]
        %vm258 = vcmask 64512
        %v259 = vsel %vm258, %v178, -inf
        %260 = vmax.xlane.f32.xlu0 %v259
        %v261 = vpop.xlane.xlu0 %260
        %v262 = vmax.f32 %v257, %v261
        %v263 = vsub.f32 %v257, %v262
        %v264 = vmul.f32 %v263, 1.442695
        %v265 = vpow.pop %v264
        %v266 = vld [vmem:[#allocation3] sm:$0xff]
        %v267 = vmul.f32 %v266, %v265
        %269 = vset.pattern.permute.xlu0 0
        %270 = vperm.xlu0 %269, %v262
        %v271 = vpop.permute.xlu0 %270
        %v273 = vsub.f32 %v178, %v271
        %v274 = vmul.f32 %v273, 1.442695
        %v275 = vpow.pop %v274
        %v276 = vsel %vm258, %v275, 0.0
        %277 = vadd.xlane.f32.xlu0 %v276
        %v278 = vpop.xlane.xlu0 %277
        %v279 = vadd.f32 %v267, %v278
        %vm280 = vcmask 7168
        %281 = vst.msk [vmem:[#allocation3] sm:$0xff] %vm280, %v279
        %282 = vst.msk [vmem:[#allocation2] sm:$0xff] %vm280, %v262
      $region44: #{simclr_loss.1} parent=27 // pred_fallthru
        _
      %p283 = scmp.eq.s32.totalorder %s18, 3
      // Predicated region
      $region45: #{simclr_loss.1} parent=27 // pred_check
        %p284 = pneg %p283
      $region46: #{simclr_loss.1} parent=27 // pred_check_branch
        %286 = sbr.rel (%p284) target = $region48
      $region47: #{simclr_loss.1} parent=27 // pred_region
        %v287 = vld [vmem:[#allocation2] sm:$0xff]
        %v288 = vld [vmem:[#allocation3] sm:$0xff]
        %v289 = vlog2.pop %v288
        %v290 = vmul.f32 %v289, 0.6931472
        %v291 = vadd.f32 %v287, %v290
        %v292 = vld [vmem:[#allocation4] sm:$0xff]
        %v293 = vsub.f32 %v291, %v292
        %vm294 = vcmask 7168
        %295 = vst.msk [vmem:[%s150] sm:$0xff] %vm294, %v293
      $region48: #{simclr_loss.1} parent=27 // pred_fallthru
        _
      %p296 = scmp.lt.s32.totalorder %s17, 3
      %s297 = scalar_select %p296, %s17, 3
      %s298 = smul.addr %s297, 8
      %s299 = scalar_lea.vmem %s2, %s298
      // Predicated region
      $region49: #{simclr_loss.1} parent=27 // pred_check
        %p300 = pneg %p90
      $region50: #{simclr_loss.1} parent=27 // pred_check_branch
        %302 = sbr.rel (%p300) target = $region52
      $region51: #{simclr_loss.1} parent=27 // pred_region
        _
      $region52: #{simclr_loss.1} parent=27 // pred_fallthru
        _
    $region28: #{simclr_loss.1} parent=5 // pred_fallthru
      _
    %p303 = scmp.le.s32.totalorder 2, %s8
    // Predicated region
    $region53: #{simclr_loss.1} parent=5 // pred_check
      %p304 = pneg %p303
    $region54: #{simclr_loss.1} parent=5 // pred_check_branch
      %306 = sbr.rel (%p304) target = $region56
    $region55: #{simclr_loss.1} parent=5 // pred_region
      %s307 = ssub.s32 %s8, 2
      // Predicated region
      $region57: #{simclr_loss.1} parent=55 // pred_check
        %p308 = pneg %p96
      $region58: #{simclr_loss.1} parent=55 // pred_check_branch
        %310 = sbr.rel (%p308) target = $region60
      $region59: #{simclr_loss.1} parent=55 // pred_region
        %p311 = scmp.lt.s32.totalorder %s19, 3
        %s312 = scalar_select %p311, %s19, 3
        %s313 = smul.addr %s312, 8
        %s314 = scalar_lea.vmem %s2, %s313
      $region60: #{simclr_loss.1} parent=55 // pred_fallthru
        _
    $region56: #{simclr_loss.1} parent=5 // pred_fallthru
      _
  $region6: #{simclr_loss.1} parent=0 // loop_footer
    %s12 = sadd.s32 1, %s8
  $region7: #{simclr_loss.1} parent=0 // loop_footer_branch
    %7 = sbr.rel target = $region3
  $region8: #{simclr_loss.1} parent=0 // loop_exit
    _

</llo_original>
